<compile_context>
chip_gen: v6e
topology: v6e:2x2x1
jax: 0.10.0
libtpu: 0.0.40
codegen_flags: <defaults>
</compile_context>

<pallas_src>
import jax
import jax.numpy as jnp
from jax import lax
from jax.experimental import pallas as pl
from jax.experimental.pallas import tpu as pltpu

KERNEL_SIZE = 2
_LANE = 128
_MiB = 1 << 20


def _round_up(a: int, b: int) -> int:
    return (a + b - 1) // b * b


def _sublane(dtype) -> int:
    # f32 -> 8, bf16 -> 16, int8/fp8 -> 32 packed sublanes per native tile.
    return max(8, 32 // jnp.dtype(dtype).itemsize)


def _vmem_capacity_bytes() -> int:
    try:
        return int(pltpu.get_tpu_info().vmem_capacity_bytes)
    except Exception:
        return 64 * _MiB  # conservative (v7x per-TensorCore VMEM)


# ---------------------------------------------------------------------------
# Kernels
# ---------------------------------------------------------------------------
def _conv1d_kernel_rows(x_ref, w_ref, b_ref, o_ref):
    """Batch-tiled path: the block spans the full length L (o block is L-1 wide)."""
    x = x_ref[...]                       # (TN, L)
    l_out = o_ref.shape[1]               # L - 1
    w0 = w_ref[0]
    w1 = w_ref[1]
    b = b_ref[0]
    y = x[:, :l_out] * w0 + x[:, 1:l_out + 1] * w1 + b
    o_ref[...] = y.astype(o_ref.dtype)


def _conv1d_kernel_ltiled(x_ref, halo_ref, w_ref, b_ref, o_ref):
    """L-tiled path: 128-aligned L tiles with a 1-column halo for the second tap."""
    x = x_ref[...]                       # (TN, TL), TL multiple of 128
    tl = x.shape[1]
    # x_next[:, c] = x[:, c + 1] for c < TL-1 (roll wraps at the tile end); the wrapped
    # last column is replaced by the halo column (first element of the next L tile).
    x_next = pltpu.roll(x, shift=tl - 1, axis=1)
    col = lax.broadcasted_iota(jnp.int32, x.shape, 1)
    x_next = jnp.where(col == tl - 1, halo_ref[:, 0:1], x_next)
    w0 = w_ref[0]
    w1 = w_ref[1]
    b = b_ref[0]
    o_ref[...] = (x * w0 + x_next * w1 + b).astype(o_ref.dtype)


# ---------------------------------------------------------------------------
# Wrapper
# ---------------------------------------------------------------------------
def my_conv1d(x, weight, bias, *, max_block_bytes=None):
    """x: (N, 1, L); weight: (1, 1, 2); bias: (1,).  Returns (N, 1, L-1)."""
    n, c, l = x.shape
    assert c == 1, "Conv1d(1, 1, 2): single input channel expected"
    assert l >= KERNEL_SIZE
    l_out = l - KERNEL_SIZE + 1

    x2 = x.reshape(n, l)                 # dropping the size-1 channel axis is free
    w_flat = weight.reshape(KERNEL_SIZE)
    b_flat = bias.reshape(1)

    itemsize = jnp.dtype(x.dtype).itemsize
    sub = _sublane(x.dtype)

    # Generation-aware VMEM budget: pipeline footprint ~ 4 blocks (2 in + 2 out
    # double buffers) plus Mosaic elementwise temporaries -> ~8x block per limit.
    vmem_cap = _vmem_capacity_bytes()
    vmem_limit = int(min(max(vmem_cap - 16 * _MiB, 32 * _MiB), 64 * _MiB))
    block_budget = max(_MiB // 4, vmem_limit // 8)
    if max_block_bytes is not None:      # test hook / manual override
        block_budget = min(block_budget, int(max_block_bytes))

    flops = 4 * n * l_out
    bytes_accessed = (n * l + n * l_out) * itemsize
    cost = pl.CostEstimate(flops=flops, transcendentals=0,
                           bytes_accessed=bytes_accessed)

    row_bytes = l * itemsize
    if sub * row_bytes <= block_budget:
        # ---- Path A: batch-only tiling; each block spans the full length L. ----
        tn_cap = max(sub, (block_budget // row_bytes) // sub * sub)
        desired = _round_up(pl.cdiv(n, 4), sub)      # aim for >=4 grid steps
        tn = max(sub, min(tn_cap, desired))
        if n <= tn:
            tn = n                                   # block dim == full dim is exempt
        grid = (pl.cdiv(n, tn),)                     # partial last batch block: masked

        out = pl.pallas_call(
            _conv1d_kernel_rows,
            out_shape=jax.ShapeDtypeStruct((n, l_out), x.dtype),
            grid=grid,
            in_specs=[
                pl.BlockSpec((tn, l), lambda i: (i, 0)),     # pipelined batch tiles
                pl.BlockSpec(memory_space=pltpu.SMEM),       # weight taps (scalars)
                pl.BlockSpec(memory_space=pltpu.SMEM),       # bias (scalar)
            ],
            out_specs=pl.BlockSpec((tn, l_out), lambda i: (i, 0)),
            compiler_params=pltpu.CompilerParams(
                dimension_semantics=("parallel",),
                vmem_limit_bytes=vmem_limit,
            ),
            cost_estimate=cost,
        )(x2, w_flat, b_flat)
    else:
        # ---- Path B: L-tiling with a 1-column halo for the second tap. ----
        tn = sub if n >= sub else n
        tl = max(_LANE, (block_budget // (tn * itemsize)) // _LANE * _LANE)
        bpt = tl // _LANE                            # 128-wide lane blocks per L tile
        max_lblk = pl.cdiv(l, _LANE) - 1             # last valid 128-wide block of x
        grid = (pl.cdiv(n, tn), pl.cdiv(l_out, tl))

        def halo_map(i, j):
            # First 128 columns of the *next* L tile; clamped for the last tile
            # (whose wrapped column is masked away on writeback anyway).
            return (i, jnp.minimum((j + 1) * bpt, max_lblk))

        out = pl.pallas_call(
            _conv1d_kernel_ltiled,
            out_shape=jax.ShapeDtypeStruct((n, l_out), x.dtype),
            grid=grid,
            in_specs=[
                pl.BlockSpec((tn, tl), lambda i, j: (i, j)),   # main input tile
                pl.BlockSpec((tn, _LANE), halo_map),           # 1-col halo (next tile)
                pl.BlockSpec(memory_space=pltpu.SMEM),         # weight taps
                pl.BlockSpec(memory_space=pltpu.SMEM),         # bias
            ],
            out_specs=pl.BlockSpec((tn, tl), lambda i, j: (i, j)),
            compiler_params=pltpu.CompilerParams(
                dimension_semantics=("parallel", "parallel"),
                vmem_limit_bytes=vmem_limit,
            ),
            cost_estimate=cost,
        )(x2, x2, w_flat, b_flat)

    return out.reshape(n, 1, l_out)


def _reference(x, weight, bias):
    return (x[:, :, :-1] * weight[0, 0, 0]
            + x[:, :, 1:] * weight[0, 0, 1]
            + bias[0])


if __name__ == "__main__":
    key = jax.random.PRNGKey(0)
    kx, kw, kb, kx2, kx3 = jax.random.split(key, 5)

    # PyTorch-default-style init bounds for Conv1d(1, 1, 2).
    fan_in = 1 * KERNEL_SIZE
    bound = 1.0 / (fan_in ** 0.5)
    weight = jax.random.uniform(kw, (1, 1, KERNEL_SIZE), jnp.float32, -bound, bound)
    bias = jax.random.uniform(kb, (1,), jnp.float32, -bound, bound)

    # 1) Small shape consistent with Conv1d(1, 1, 2): batch=2, channels=1, length=16.
    x = jax.random.normal(kx, (2, 1, 16), dtype=jnp.float32)
    y = jax.block_until_ready(my_conv1d(x, weight, bias))
    assert y.shape == (2, 1, 15), y.shape
    assert jnp.allclose(y, _reference(x, weight, bias), atol=1e-5), "mismatch (small)"

    # 2) Batch-tiled case with a partial last batch block (grid > 1, no padding).
    x_big = jax.random.normal(kx2, (20, 1, 200), dtype=jnp.float32)
    y_big = jax.block_until_ready(my_conv1d(x_big, weight, bias))
    assert y_big.shape == (20, 1, 199), y_big.shape
    assert jnp.allclose(y_big, _reference(x_big, weight, bias), atol=1e-5), \
        "mismatch (batch-tiled)"

    # 3) Forced L-tiling path: interior-tile halo correctness, clamped halo at the
    #    last tile, partial batch block and partial L block, via a tiny block budget.
    x_long = jax.random.normal(kx3, (12, 1, 700), dtype=jnp.float32)
    y_long = jax.block_until_ready(
        my_conv1d(x_long, weight, bias, max_block_bytes=8 * 1024))
    assert y_long.shape == (12, 1, 699), y_long.shape
    assert jnp.allclose(y_long, _reference(x_long, weight, bias), atol=1e-5), \
        "mismatch (L-tiled)"

    print("KERNEL_OK")
</pallas_src>

<mosaic_0001>
module attributes {stable_mosaic.version = 11 : i64} {
  func.func @_conv1d_kernel_rows(%arg0: i32, %arg1: memref<2x16xf32, #tpu.memory_space<vmem>>, %arg2: memref<2xf32, #tpu.memory_space<smem>>, %arg3: memref<1xf32, #tpu.memory_space<smem>>, %arg4: memref<2x15xf32, #tpu.memory_space<vmem>>) attributes {dimension_semantics = [#tpu.dimension_semantics<parallel>], iteration_bounds = array<i64: 1>, scalar_prefetch = 0 : i64, scratch_operands = 0 : i64, tpu.core_type = #tpu.core_type<tc>, window_params = [{transform_indices = @transform_0, window_bounds = array<i64: 2, 16>}, {transform_indices = @transform_1, window_bounds = array<i64: 2>}, {transform_indices = @transform_2, window_bounds = array<i64: 1>}, {transform_indices = @transform_3, window_bounds = array<i64: 2, 15>}]} {
    %c0 = arith.constant 0 : index
    %c0_0 = arith.constant 0 : index
    %0 = vector.load %arg1[%c0, %c0_0] : memref<2x16xf32, #tpu.memory_space<vmem>>, vector<2x16xf32>
    %c0_1 = arith.constant 0 : index
    %1 = memref.load %arg2[%c0_1] : memref<2xf32, #tpu.memory_space<smem>>
    %c1 = arith.constant 1 : index
    %2 = memref.load %arg2[%c1] : memref<2xf32, #tpu.memory_space<smem>>
    %c0_2 = arith.constant 0 : index
    %3 = memref.load %arg3[%c0_2] : memref<1xf32, #tpu.memory_space<smem>>
    %4 = vector.extract_strided_slice %0 {offsets = [0, 0], sizes = [2, 15], strides = [1, 1]} : vector<2x16xf32> to vector<2x15xf32>
    %5 = vector.broadcast %1 : f32 to vector<2x15xf32>
    %6 = arith.mulf %4, %5 : vector<2x15xf32>
    %7 = vector.extract_strided_slice %0 {offsets = [0, 1], sizes = [2, 15], strides = [1, 1]} : vector<2x16xf32> to vector<2x15xf32>
    %8 = vector.broadcast %2 : f32 to vector<2x15xf32>
    %9 = arith.mulf %7, %8 : vector<2x15xf32>
    %10 = arith.addf %6, %9 : vector<2x15xf32>
    %11 = vector.broadcast %3 : f32 to vector<2x15xf32>
    %12 = arith.addf %10, %11 : vector<2x15xf32>
    %c0_3 = arith.constant 0 : index
    %c0_4 = arith.constant 0 : index
    %13 = vector.load %arg4[%c0_3, %c0_4] : memref<2x15xf32, #tpu.memory_space<vmem>>, vector<2x15xf32>
    tpu.vector_store %arg4[%c0_3, %c0_4], %12 {strides = array<i32>} : memref<2x15xf32, #tpu.memory_space<vmem>>, vector<2x15xf32>,
    return
  }
  func.func @transform_0(%arg0: i32) -> (i32, i32) {
    %c0_i32 = arith.constant 0 : i32
    %c0_i32_0 = arith.constant 0 : i32
    return %arg0, %c0_i32 : i32, i32
  }
  func.func @transform_1(%arg0: i32) -> i32 {
    %c0_i32 = arith.constant 0 : i32
    %c0_i32_0 = arith.constant 0 : i32
    return %c0_i32 : i32
  }
  func.func @transform_2(%arg0: i32) -> i32 {
    %c0_i32 = arith.constant 0 : i32
    %c0_i32_0 = arith.constant 0 : i32
    return %c0_i32 : i32
  }
  func.func @transform_3(%arg0: i32) -> (i32, i32) {
    %c0_i32 = arith.constant 0 : i32
    %c0_i32_0 = arith.constant 0 : i32
    return %arg0, %c0_i32 : i32, i32
  }
}

</mosaic_0001>

<llo_original>
// kernel: tpu_custom_call.1
$region0: #{tpu_custom_call.1}
  #allocation0 [shape = 'u32[]', space=smem, size = 0x4, offset = 0x4, fixed_abs, tag = 'smem constant byte address 0x4 - core index']
  #allocation1 [shape = 'u32[144,128]{1,0:T(1,128)}', space=vmem, size = 0x12000, scoped, tag = 'internal scratch']
  #allocation2 [shape = 'f32[1]{0:T(128)S(6)}', space=smem, size = 0x200, scoped, tag = 'scoped memory for tpu_custom_call.1']
  %s0 = inlined_call_operand.vmem [shape: f32[2,16], index: 0, kind: input, shape index: {}]
  %s1 = inlined_call_operand.vmem [shape: f32[2], index: 1, kind: input, shape index: {}]
  %s2 = inlined_call_operand.<no memory space> [shape: f32[1], index: 2, kind: input, shape index: {}]
  %s3 = inlined_call_operand.hbm [shape: f32[2,15], index: 3, kind: output, shape index: {}]
  %s4 = sld [smem:[#allocation0]]
  $region26: #{tpu_custom_call.1} parent=0
    _
  %s6 = ssub.s32 1, %s4
  %s7 = scalar_select 0, %s6, %s4
  %8 = sst [smem:[#allocation2]] %s2
  $region1: #{tpu_custom_call.1} parent=0
    #allocation3 [shape = 'u8[512]{0}', space=smem, size = 0x200, scoped, tag = 'input window, operand 1, single buffered']
    #allocation4 [shape = 's32[1]{0}', space=sflag, size = 0x4, scoped, tag = 'scoped memory for tpu_custom_call.1']
    #allocation5 [shape = 's32[1]{0}', space=sflag, size = 0x4, scoped, tag = 'scoped memory for tpu_custom_call.1']
    #allocation6 [shape = 'u8[1024]{0}', space=vmem, size = 0x400, scoped, tag = 'output window, operand 0, single buffered']
    %9 = vsyncpa [#allocation5], 0
    %10 = vsyncpa [#allocation4], 0
    // Predicated region
    $region2: #{tpu_custom_call.1} parent=1 // pred_check
      _
    $region3: #{tpu_custom_call.1} parent=1 // pred_check_branch
      %12 = sbr.rel (0) target = $region5
    $region4: #{tpu_custom_call.1} parent=1 // pred_region
      _
    $region5: #{tpu_custom_call.1} parent=1 // pred_fallthru
      _
    // Predicated region
    $region6: #{tpu_custom_call.1} parent=1 // pred_check
      _
    $region7: #{tpu_custom_call.1} parent=1 // pred_check_branch
      %14 = sbr.rel (0) target = $region9
    $region8: #{tpu_custom_call.1} parent=1 // pred_region
      %s16 = ssub.s32 16, 16
      %17 = vsyncadd [#allocation5], %s16
      %s19 = sshll.u32 %s1, 4
      %s20 = int_to_ptr.vmem [resolvable:$true] %s19
      %22 = dma.vmem_to_smem %s20, 16, [#allocation3], [#allocation5]
    $region9: #{tpu_custom_call.1} parent=1 // pred_fallthru
      _
    // Predicated region
    $region10: #{tpu_custom_call.1} parent=1 // pred_check
      _
    $region11: #{tpu_custom_call.1} parent=1 // pred_check_branch
      %24 = sbr.rel (0) target = $region13
    $region12: #{tpu_custom_call.1} parent=1 // pred_region
      _
    $region13: #{tpu_custom_call.1} parent=1 // pred_fallthru
      _
    // Predicated region
    $region14: #{tpu_custom_call.1} parent=1 // pred_check
      _
    $region15: #{tpu_custom_call.1} parent=1 // pred_check_branch
      %26 = sbr.rel (0) target = $region17
    $region16: #{tpu_custom_call.1} parent=1 // pred_region
      %27 = dma.done [#allocation5], 16
    $region17: #{tpu_custom_call.1} parent=1 // pred_fallthru
      _
    %28 = sfence
    %v29 = vld [vmem:[%s0] sm:$0x3]
    %s30 = sld [smem:[#allocation3]]
    %s31 = sld [smem:[#allocation3 + $0x1]]
    %s32 = sld [smem:[#allocation2]]
    %v33 = vstv %s30
    %v34 = vmul.f32 %v29, %v33
    %v35 = vstv %s31
    %v36 = vmul.f32 %v29, %v35
    %38 = vrot.lane.b32.xlu0 %v36, 127
    %v39 = vpop.permute.xlu0 %38
    %v41 = vadd.f32 %v34, %v39
    %v42 = vstv %s32
    %v43 = vadd.f32 %v41, %v42
    %vm44 = vcmask 115712
    %45 = vst.msk [vmem:[#allocation6] sm:$0x3] %vm44, %v43
    // Predicated region
    $region18: #{tpu_custom_call.1} parent=1 // pred_check
      _
    $region19: #{tpu_custom_call.1} parent=1 // pred_check_branch
      %47 = sbr.rel (0) target = $region21
    $region20: #{tpu_custom_call.1} parent=1 // pred_region
      %s49 = ssub.s32 32, 32
      %50 = vsyncadd [#allocation4], %s49
      %s52 = sshll.u32 [#allocation6], 4
      %s53 = int_to_ptr.vmem [resolvable:$true] %s52
      %55 = dma.vmem_to_hbm [thread:$0]  %s53, 32, %s3, [#allocation4]
    $region21: #{tpu_custom_call.1} parent=1 // pred_fallthru
      _
    // Predicated region
    $region22: #{tpu_custom_call.1} parent=1 // pred_check
      _
    $region23: #{tpu_custom_call.1} parent=1 // pred_check_branch
      %57 = sbr.rel (0) target = $region25
    $region24: #{tpu_custom_call.1} parent=1 // pred_region
      %58 = dma.done [#allocation4], 32
    $region25: #{tpu_custom_call.1} parent=1 // pred_fallthru
      _
    %59 = vsyncpa [#allocation4], 1
    %60 = vsyncpa [#allocation5], 1

</llo_original>
